<compile_context>
chip_gen: v5e
topology: v5e:2x2
jax: 0.10.0
libtpu: 0.0.40
codegen_flags: <defaults>
</compile_context>

<pallas_src>
import math

import jax
import jax.numpy as jnp
from jax.experimental import pallas as pl
from jax.experimental.pallas import tpu as pltpu


def _integral_kernel(x_ref, wnum_ref, wden_ref, o_ref):
    """x_ref: (T, 4R) logits per anchor; o_ref: (T, 4) expected offsets."""
    x = x_ref[...].astype(jnp.float32)                       # (T, 4R)
    # Single shift-invariant max over all 4R lanes (one XLU reduction/anchor).
    m = jnp.max(x, axis=-1, keepdims=True)                   # (T, 1)
    e = jnp.exp(x - m)                                        # (T, 4R)  EUP
    # Block-diagonal projections on the MXU: per-segment numerator & denominator.
    num = jnp.dot(e, wnum_ref[...], preferred_element_type=jnp.float32)  # (T, 4)
    den = jnp.dot(e, wden_ref[...], preferred_element_type=jnp.float32)  # (T, 4)
    # Guard: a segment sitting >~87 below the anchor-wide max would underflow
    # to den == 0 -> NaN.  Pathological for detection logits, but cheap to stop.
    den = jnp.maximum(den, jnp.finfo(jnp.float32).tiny)
    o_ref[...] = (num / den).astype(o_ref.dtype)


def integral(x, reg_max=16, tile_rows=8192):
    """Pallas implementation of mmdet's Integral.forward.

    Args:
      x: (..., 4*(reg_max+1)) regression logits.
      reg_max: maximum value of the discrete set {0, ..., reg_max}.
      tile_rows: anchors per grid step.  The default streams ~2.2 MB of HBM
        per step (f32); padded VMEM use is covered by vmem_limit_bytes below.

    Returns:
      (..., 4) expected distance offsets, same dtype as x.
    """
    R = reg_max + 1
    C = 4 * R
    shape = x.shape
    assert shape[-1] == C, f"last dim must be 4*(reg_max+1)={C}, got {shape[-1]}"
    lead = shape[:-1]
    n = math.prod(lead) if lead else 1

    # Free reinterpretation: one anchor (four distributions) per row.
    x2 = x.reshape(n, C)

    # Constant block-diagonal projection matrices (built once, constant-folded).
    lane = jnp.arange(C)
    onehot = (lane[:, None] // R == jnp.arange(4)[None, :]).astype(jnp.float32)
    w_den = onehot                                              # (C, 4)
    w_num = onehot * (lane % R).astype(jnp.float32)[:, None]    # (C, 4)

    # ---- Tile selection -------------------------------------------------
    t = min(int(tile_rows), n)
    # Megacore (v7x): if everything fits one block but there is real work,
    # split into >=2 grid steps so both TensorCores get a share.
    if n >= 2048 and t >= n:
        t = -(-n // 2)
    # Row-block must be a multiple of 8 sublanes unless it equals the full dim.
    if t != n:
        t = max(8, (t // 8) * 8)
    num_steps = pl.cdiv(n, t)

    # Lane padding makes the real VMEM cost ~512 B/row per buffer for both the
    # (t, C) input and the (t, 4) output; budget double-buffering + the
    # materialised exp intermediate explicitly.
    vmem_limit = int(min(48 * 2**20, max(32 * 2**20, 5 * 1024 * t)))

    out = pl.pallas_call(
        _integral_kernel,
        out_shape=jax.ShapeDtypeStruct((n, 4), x.dtype),
        grid=(num_steps,),
        in_specs=[
            pl.BlockSpec((t, C), lambda i: (i, 0)),
            pl.BlockSpec((C, 4), lambda i: (0, 0)),   # resident constant
            pl.BlockSpec((C, 4), lambda i: (0, 0)),   # resident constant
        ],
        out_specs=pl.BlockSpec((t, 4), lambda i: (i, 0)),
        compiler_params=pltpu.CompilerParams(
            dimension_semantics=("parallel",),
            vmem_limit_bytes=vmem_limit,
        ),
    )(x2, w_num, w_den)

    return out.reshape(*lead, 4)


def integral_ref(x, reg_max=16):
    """Pure-JAX reference matching the PyTorch module."""
    R = reg_max + 1
    shape = x.shape
    p = jax.nn.softmax(x.reshape(*shape[:-1], 4, R).astype(jnp.float32), axis=-1)
    proj = jnp.arange(R, dtype=jnp.float32)
    return jnp.sum(p * proj, axis=-1).astype(x.dtype)


if __name__ == "__main__":
    reg_max = 16
    R = reg_max + 1
    key = jax.random.PRNGKey(0)
    k1, k2 = jax.random.split(key)

    # Shape documented by the module: (N, 4*(reg_max+1)).
    x = jax.random.normal(k1, (64, 4 * R), dtype=jnp.float32) * 3.0
    out = jax.block_until_ready(integral(x, reg_max=reg_max))
    ref = integral_ref(x, reg_max=reg_max)
    assert out.shape == (64, 4), out.shape
    err = float(jnp.max(jnp.abs(out - ref)))
    assert jnp.allclose(out, ref, atol=1e-3, rtol=1e-3), err

    # Leading batch dims + a multi-step grid with a ragged last tile
    # (n_anchors = 200, tile = 96 -> 3 steps, last block partially valid).
    x2 = jax.random.normal(k2, (2, 100, 4 * R), dtype=jnp.float32) * 3.0
    out2 = jax.block_until_ready(integral(x2, reg_max=reg_max, tile_rows=96))
    ref2 = integral_ref(x2, reg_max=reg_max)
    assert out2.shape == (2, 100, 4), out2.shape
    err2 = float(jnp.max(jnp.abs(out2 - ref2)))
    assert jnp.allclose(out2, ref2, atol=1e-3, rtol=1e-3), err2

    print("KERNEL_OK")
</pallas_src>

<mosaic_0001>
module attributes {stable_mosaic.version = 11 : i64} {
  func.func @_integral_kernel(%arg0: i32, %arg1: memref<64x68xf32, #tpu.memory_space<vmem>>, %arg2: memref<68x4xf32, #tpu.memory_space<vmem>>, %arg3: memref<68x4xf32, #tpu.memory_space<vmem>>, %arg4: memref<64x4xf32, #tpu.memory_space<vmem>>) attributes {dimension_semantics = [#tpu.dimension_semantics<parallel>], iteration_bounds = array<i64: 1>, scalar_prefetch = 0 : i64, scratch_operands = 0 : i64, tpu.core_type = #tpu.core_type<tc>, window_params = [{transform_indices = @transform_0, window_bounds = array<i64: 64, 68>}, {pipeline_mode = #tpu.pipeline_mode<synchronous>, transform_indices = @transform_1, window_bounds = array<i64: 68, 4>}, {pipeline_mode = #tpu.pipeline_mode<synchronous>, transform_indices = @transform_2, window_bounds = array<i64: 68, 4>}, {transform_indices = @transform_3, window_bounds = array<i64: 64, 4>}]} {
    %c0 = arith.constant 0 : index
    %c0_0 = arith.constant 0 : index
    %0 = vector.load %arg1[%c0, %c0_0] : memref<64x68xf32, #tpu.memory_space<vmem>>, vector<64x68xf32>
    %cst = arith.constant dense<0xFF800000> : vector<64xf32>
    %1 = vector.multi_reduction <maximumf>, %0, %cst [1] : vector<64x68xf32> to vector<64xf32>
    %2 = vector.shape_cast %1 : vector<64xf32> to vector<64x1xf32>
    %3 = vector.broadcast %2 : vector<64x1xf32> to vector<64x68xf32>
    %4 = arith.subf %0, %3 : vector<64x68xf32>
    %5 = math.exp %4 : vector<64x68xf32>
    %c0_1 = arith.constant 0 : index
    %c0_2 = arith.constant 0 : index
    %6 = vector.load %arg2[%c0_1, %c0_2] : memref<68x4xf32, #tpu.memory_space<vmem>>, vector<68x4xf32>
    %cst_3 = arith.constant dense<0.000000e+00> : vector<64x4xf32>
    %7 = tpu.matmul %5, %6, %cst_3 {dimension_numbers = #tpu.dot_dimension_numbers<[1], [0], [0], [1], [0, 0, 1, 1], [], []>} : vector<64x68xf32>, vector<68x4xf32>, vector<64x4xf32> -> vector<64x4xf32>
    %c0_4 = arith.constant 0 : index
    %c0_5 = arith.constant 0 : index
    %8 = vector.load %arg3[%c0_4, %c0_5] : memref<68x4xf32, #tpu.memory_space<vmem>>, vector<68x4xf32>
    %cst_6 = arith.constant dense<0.000000e+00> : vector<64x4xf32>
    %9 = tpu.matmul %5, %8, %cst_6 {dimension_numbers = #tpu.dot_dimension_numbers<[1], [0], [0], [1], [0, 0, 1, 1], [], []>} : vector<64x68xf32>, vector<68x4xf32>, vector<64x4xf32> -> vector<64x4xf32>
    %cst_7 = arith.constant 1.17549435E-38 : f32
    %10 = vector.broadcast %cst_7 : f32 to vector<64x4xf32>
    %11 = arith.maximumf %9, %10 : vector<64x4xf32>
    %12 = arith.divf %7, %11 : vector<64x4xf32>
    %c0_8 = arith.constant 0 : index
    %c0_9 = arith.constant 0 : index
    %13 = vector.load %arg4[%c0_8, %c0_9] : memref<64x4xf32, #tpu.memory_space<vmem>>, vector<64x4xf32>
    tpu.vector_store %arg4[%c0_8, %c0_9], %12 {strides = array<i32>} : memref<64x4xf32, #tpu.memory_space<vmem>>, vector<64x4xf32>,
    return
  }
  func.func @transform_0(%arg0: i32) -> (i32, i32) {
    %c0_i32 = arith.constant 0 : i32
    %c0_i32_0 = arith.constant 0 : i32
    return %arg0, %c0_i32 : i32, i32
  }
  func.func @transform_1(%arg0: i32) -> (i32, i32) {
    %c0_i32 = arith.constant 0 : i32
    %c0_i32_0 = arith.constant 0 : i32
    %c0_i32_1 = arith.constant 0 : i32
    return %c0_i32, %c0_i32_0 : i32, i32
  }
  func.func @transform_2(%arg0: i32) -> (i32, i32) {
    %c0_i32 = arith.constant 0 : i32
    %c0_i32_0 = arith.constant 0 : i32
    %c0_i32_1 = arith.constant 0 : i32
    return %c0_i32, %c0_i32_0 : i32, i32
  }
  func.func @transform_3(%arg0: i32) -> (i32, i32) {
    %c0_i32 = arith.constant 0 : i32
    %c0_i32_0 = arith.constant 0 : i32
    return %arg0, %c0_i32 : i32, i32
  }
}

</mosaic_0001>

<llo_original>
// kernel: tpu_custom_call.1
$region0: #{tpu_custom_call.1}
  #allocation0 [shape = 'u32[]', space=smem, size = 0x4, offset = 0x4, fixed_abs, tag = 'smem constant byte address 0x4 - core index']
  #allocation1 [shape = 'u32[72,128]{1,0:T(1,128)}', space=vmem, size = 0x9000, scoped, tag = 'internal scratch']
  %s0 = inlined_call_operand.vmem [shape: f32[64,68], index: 0, kind: input, shape index: {}]
  %s1 = inlined_call_operand.vmem [shape: f32[68,4], index: 1, kind: input, shape index: {}]
  %s2 = inlined_call_operand.vmem [shape: f32[68,4], index: 2, kind: input, shape index: {}]
  %s3 = inlined_call_operand.vmem [shape: f32[64,4], index: 3, kind: output, shape index: {}]
  %s4 = sld [smem:[#allocation0]]
  $region22: #{tpu_custom_call.1} parent=0
    _
  %s6 = ssub.s32 1, %s4
  %s7 = scalar_select 0, %s6, %s4
  // Predicated region
  $region2: #{tpu_custom_call.1} parent=0 // pred_check
    _
  $region3: #{tpu_custom_call.1} parent=0 // pred_check_branch
    %9 = sbr.rel (0) target = $region5
  $region4: #{tpu_custom_call.1} parent=0 // pred_region
    _
  $region5: #{tpu_custom_call.1} parent=0 // pred_fallthru
    _
  // Predicated region
  $region6: #{tpu_custom_call.1} parent=0 // pred_check
    _
  $region7: #{tpu_custom_call.1} parent=0 // pred_check_branch
    %11 = sbr.rel (0) target = $region9
  $region8: #{tpu_custom_call.1} parent=0 // pred_region
    _
  $region9: #{tpu_custom_call.1} parent=0 // pred_fallthru
    _
  // Predicated region
  $region10: #{tpu_custom_call.1} parent=0 // pred_check
    _
  $region11: #{tpu_custom_call.1} parent=0 // pred_check_branch
    %13 = sbr.rel (0) target = $region13
  $region12: #{tpu_custom_call.1} parent=0 // pred_region
    _
  $region13: #{tpu_custom_call.1} parent=0 // pred_fallthru
    _
  %v14 = vld [vmem:[%s0] sm:$0xff]
  %v15 = vld [vmem:[%s0 + $0x8] sm:$0xff]
  %v16 = vld [vmem:[%s0 + $0x10] sm:$0xff]
  %v17 = vld [vmem:[%s0 + $0x18] sm:$0xff]
  %v18 = vld [vmem:[%s0 + $0x20] sm:$0xff]
  %v19 = vld [vmem:[%s0 + $0x28] sm:$0xff]
  %v20 = vld [vmem:[%s0 + $0x30] sm:$0xff]
  %v21 = vld [vmem:[%s0 + $0x38] sm:$0xff]
  %vm22 = vcmask 556032
  %v23 = vsel %vm22, %v14, -inf
  %24 = vmax.xlane.f32.xlu0 %v23
  %v25 = vpop.xlane.xlu0 %24
  %v26 = vsel %vm22, %v15, -inf
  %27 = vmax.xlane.f32.xlu0 %v26
  %v28 = vpop.xlane.xlu0 %27
  %v29 = vsel %vm22, %v16, -inf
  %30 = vmax.xlane.f32.xlu0 %v29
  %v31 = vpop.xlane.xlu0 %30
  %v32 = vsel %vm22, %v17, -inf
  %33 = vmax.xlane.f32.xlu0 %v32
  %v34 = vpop.xlane.xlu0 %33
  %v35 = vsel %vm22, %v18, -inf
  %36 = vmax.xlane.f32.xlu0 %v35
  %v37 = vpop.xlane.xlu0 %36
  %v38 = vsel %vm22, %v19, -inf
  %39 = vmax.xlane.f32.xlu0 %v38
  %v40 = vpop.xlane.xlu0 %39
  %v41 = vsel %vm22, %v20, -inf
  %42 = vmax.xlane.f32.xlu0 %v41
  %v43 = vpop.xlane.xlu0 %42
  %v44 = vsel %vm22, %v21, -inf
  %45 = vmax.xlane.f32.xlu0 %v44
  %v46 = vpop.xlane.xlu0 %45
  %v47 = vsub.f32 %v14, %v25
  %v48 = vsub.f32 %v15, %v28
  %v49 = vsub.f32 %v16, %v31
  %v50 = vsub.f32 %v17, %v34
  %v51 = vsub.f32 %v18, %v37
  %v52 = vsub.f32 %v19, %v40
  %v53 = vsub.f32 %v20, %v43
  %v54 = vsub.f32 %v21, %v46
  %v55 = vmul.f32 %v47, 1.442695
  %v56 = vpow.pop %v55
  %v57 = vmul.f32 %v48, 1.442695
  %v58 = vpow.pop %v57
  %v59 = vmul.f32 %v49, 1.442695
  %v60 = vpow.pop %v59
  %v61 = vmul.f32 %v50, 1.442695
  %v62 = vpow.pop %v61
  %v63 = vmul.f32 %v51, 1.442695
  %v64 = vpow.pop %v63
  %v65 = vmul.f32 %v52, 1.442695
  %v66 = vpow.pop %v65
  %v67 = vmul.f32 %v53, 1.442695
  %v68 = vpow.pop %v67
  %v69 = vmul.f32 %v54, 1.442695
  %v70 = vpow.pop %v69
  %v71 = vld [vmem:[%s1] sm:$0xff]
  %v72 = vld [vmem:[%s1 + $0x8] sm:$0xff]
  %v73 = vld [vmem:[%s1 + $0x10] sm:$0xff]
  %v74 = vld [vmem:[%s1 + $0x18] sm:$0xff]
  %v75 = vld [vmem:[%s1 + $0x20] sm:$0xff]
  %v76 = vld [vmem:[%s1 + $0x28] sm:$0xff]
  %v77 = vld [vmem:[%s1 + $0x30] sm:$0xff]
  %v78 = vld [vmem:[%s1 + $0x38] sm:$0xff]
  %v79 = vld [vmem:[%s1 + $0x40] sm:$0xf]
  %v81 = vsel %vm22, %v56, 0
  %v84 = vsel %vm22, %v58, 0
  %v87 = vsel %vm22, %v60, 0
  %v90 = vsel %vm22, %v62, 0
  %v93 = vsel %vm22, %v64, 0
  %v96 = vsel %vm22, %v66, 0
  %v99 = vsel %vm22, %v68, 0
  %v102 = vsel %vm22, %v70, 0
  %vm104 = vcmask 1043456
  %v106 = vsel %vm104, %v79, 0
  %108 = vmatpush.msra.mxu0 0.0
  %109 = vmatpush.msra.mxu0 0.0
  %110 = vmatpush.msra.mxu0 0.0
  %111 = vmatpush.msra.mxu0 0.0
  %112 = vmatpush.msra.mxu0 0.0
  %113 = vmatpush.msra.mxu0 0.0
  %114 = vmatpush.msra.mxu0 0.0
  %115 = vmatpush.msra.mxu0 %v106
  %116 = vmatpush.msra.mxu0 %v78
  %117 = vmatpush.msra.mxu0 %v77
  %118 = vmatpush.msra.mxu0 %v76
  %119 = vmatpush.msra.mxu0 %v75
  %120 = vmatpush.msra.mxu0 %v74
  %121 = vmatpush.msra.mxu0 %v73
  %122 = vmatpush.msra.mxu0 %v72
  %123 = vmatpush.msra.mxu0 %v71
  %124 = vmatmul.f32.gmra.mxu0 %v81
  %v125 = vpop.f32.mrf.mxu0
  %v126 = vadd.f32 0.0, %v125
  %127 = vmatmul.f32.gmra.mxu0 %v84
  %v128 = vpop.f32.mrf.mxu0
  %v129 = vadd.f32 0.0, %v128
  %130 = vmatmul.f32.gmra.mxu0 %v87
  %v131 = vpop.f32.mrf.mxu0
  %v132 = vadd.f32 0.0, %v131
  %133 = vmatmul.f32.gmra.mxu0 %v90
  %v134 = vpop.f32.mrf.mxu0
  %v135 = vadd.f32 0.0, %v134
  %136 = vmatmul.f32.gmra.mxu0 %v93
  %v137 = vpop.f32.mrf.mxu0
  %v138 = vadd.f32 0.0, %v137
  %139 = vmatmul.f32.gmra.mxu0 %v96
  %v140 = vpop.f32.mrf.mxu0
  %v141 = vadd.f32 0.0, %v140
  %142 = vmatmul.f32.gmra.mxu0 %v99
  %v143 = vpop.f32.mrf.mxu0
  %v144 = vadd.f32 0.0, %v143
  %145 = vmatmul.f32.gmra.mxu0 %v102
  %v146 = vpop.f32.mrf.mxu0
  %v147 = vadd.f32 0.0, %v146
  %148 = vdwg.mxu0
  %v149 = vld [vmem:[%s2] sm:$0xff]
  %v150 = vld [vmem:[%s2 + $0x8] sm:$0xff]
  %v151 = vld [vmem:[%s2 + $0x10] sm:$0xff]
  %v152 = vld [vmem:[%s2 + $0x18] sm:$0xff]
  %v153 = vld [vmem:[%s2 + $0x20] sm:$0xff]
  %v154 = vld [vmem:[%s2 + $0x28] sm:$0xff]
  %v155 = vld [vmem:[%s2 + $0x30] sm:$0xff]
  %v156 = vld [vmem:[%s2 + $0x38] sm:$0xff]
  %v157 = vld [vmem:[%s2 + $0x40] sm:$0xf]
  %v159 = vsel %vm104, %v157, 0
  %161 = vmatpush.msra.mxu0 0.0
  %162 = vmatpush.msra.mxu0 0.0
  %163 = vmatpush.msra.mxu0 0.0
  %164 = vmatpush.msra.mxu0 0.0
  %165 = vmatpush.msra.mxu0 0.0
  %166 = vmatpush.msra.mxu0 0.0
  %167 = vmatpush.msra.mxu0 0.0
  %168 = vmatpush.msra.mxu0 %v159
  %169 = vmatpush.msra.mxu0 %v156
  %170 = vmatpush.msra.mxu0 %v155
  %171 = vmatpush.msra.mxu0 %v154
  %172 = vmatpush.msra.mxu0 %v153
  %173 = vmatpush.msra.mxu0 %v152
  %174 = vmatpush.msra.mxu0 %v151
  %175 = vmatpush.msra.mxu0 %v150
  %176 = vmatpush.msra.mxu0 %v149
  %177 = vmatmul.f32.gmra.mxu0 %v81
  %v178 = vpop.f32.mrf.mxu0
  %v179 = vadd.f32 0.0, %v178
  %180 = vmatmul.f32.gmra.mxu0 %v84
  %v181 = vpop.f32.mrf.mxu0
  %v182 = vadd.f32 0.0, %v181
  %183 = vmatmul.f32.gmra.mxu0 %v87
  %v184 = vpop.f32.mrf.mxu0
  %v185 = vadd.f32 0.0, %v184
  %186 = vmatmul.f32.gmra.mxu0 %v90
  %v187 = vpop.f32.mrf.mxu0
  %v188 = vadd.f32 0.0, %v187
  %189 = vmatmul.f32.gmra.mxu0 %v93
  %v190 = vpop.f32.mrf.mxu0
  %v191 = vadd.f32 0.0, %v190
  %192 = vmatmul.f32.gmra.mxu0 %v96
  %v193 = vpop.f32.mrf.mxu0
  %v194 = vadd.f32 0.0, %v193
  %195 = vmatmul.f32.gmra.mxu0 %v99
  %v196 = vpop.f32.mrf.mxu0
  %v197 = vadd.f32 0.0, %v196
  %198 = vmatmul.f32.gmra.mxu0 %v102
  %v199 = vpop.f32.mrf.mxu0
  %v200 = vadd.f32 0.0, %v199
  %201 = vdwg.mxu0
  %v202 = vmax.f32 %v179, 1.1754944e-38
  %v203 = vmax.f32 %v182, 1.1754944e-38
  %v204 = vmax.f32 %v185, 1.1754944e-38
  %v205 = vmax.f32 %v188, 1.1754944e-38
  %v206 = vmax.f32 %v191, 1.1754944e-38
  %v207 = vmax.f32 %v194, 1.1754944e-38
  %v208 = vmax.f32 %v197, 1.1754944e-38
  %v209 = vmax.f32 %v200, 1.1754944e-38
  %v210 = vrcp.pop %v202
  %v211 = vmul.f32 %v202, %v210
  %v212 = vsub.f32 1.0, %v211
  %v213 = vmul.f32 %v210, %v212
  %v214 = vadd.f32 %v210, %v213
  %vm215 = vweird.f32 %v202
  %vm216 = vweird.f32 %v210
  %vm217 = vmor %vm215, %vm216
  %v218 = vsel %vm217, %v210, %v214
  %v219 = vand.u32 2147483647, %v202
  %vm220 = vcmp.eq.f32.partialorder %v219, 8.507059e+37
  %v221 = vand.u32 %v202, 2147483648
  %v222 = vor.u32 1.1754944e-38, %v221
  %v223 = vsel %vm220, %v222, %v218
  %v224 = vmul.f32 %v126, %v223
  %v225 = vrcp.pop %v203
  %v226 = vmul.f32 %v203, %v225
  %v227 = vsub.f32 1.0, %v226
  %v228 = vmul.f32 %v225, %v227
  %v229 = vadd.f32 %v225, %v228
  %vm230 = vweird.f32 %v203
  %vm231 = vweird.f32 %v225
  %vm232 = vmor %vm230, %vm231
  %v233 = vsel %vm232, %v225, %v229
  %v234 = vand.u32 2147483647, %v203
  %vm235 = vcmp.eq.f32.partialorder %v234, 8.507059e+37
  %v236 = vand.u32 %v203, 2147483648
  %v237 = vor.u32 1.1754944e-38, %v236
  %v238 = vsel %vm235, %v237, %v233
  %v239 = vmul.f32 %v129, %v238
  %v240 = vrcp.pop %v204
  %v241 = vmul.f32 %v204, %v240
  %v242 = vsub.f32 1.0, %v241
  %v243 = vmul.f32 %v240, %v242
  %v244 = vadd.f32 %v240, %v243
  %vm245 = vweird.f32 %v204
  %vm246 = vweird.f32 %v240
  %vm247 = vmor %vm245, %vm246
  %v248 = vsel %vm247, %v240, %v244
  %v249 = vand.u32 2147483647, %v204
  %vm250 = vcmp.eq.f32.partialorder %v249, 8.507059e+37
  %v251 = vand.u32 %v204, 2147483648
  %v252 = vor.u32 1.1754944e-38, %v251
  %v253 = vsel %vm250, %v252, %v248
  %v254 = vmul.f32 %v132, %v253
  %v255 = vrcp.pop %v205
  %v256 = vmul.f32 %v205, %v255
  %v257 = vsub.f32 1.0, %v256
  %v258 = vmul.f32 %v255, %v257
  %v259 = vadd.f32 %v255, %v258
  %vm260 = vweird.f32 %v205
  %vm261 = vweird.f32 %v255
  %vm262 = vmor %vm260, %vm261
  %v263 = vsel %vm262, %v255, %v259
  %v264 = vand.u32 2147483647, %v205
  %vm265 = vcmp.eq.f32.partialorder %v264, 8.507059e+37
  %v266 = vand.u32 %v205, 2147483648
  %v267 = vor.u32 1.1754944e-38, %v266
  %v268 = vsel %vm265, %v267, %v263
  %v269 = vmul.f32 %v135, %v268
  %v270 = vrcp.pop %v206
  %v271 = vmul.f32 %v206, %v270
  %v272 = vsub.f32 1.0, %v271
  %v273 = vmul.f32 %v270, %v272
  %v274 = vadd.f32 %v270, %v273
  %vm275 = vweird.f32 %v206
  %vm276 = vweird.f32 %v270
  %vm277 = vmor %vm275, %vm276
  %v278 = vsel %vm277, %v270, %v274
  %v279 = vand.u32 2147483647, %v206
  %vm280 = vcmp.eq.f32.partialorder %v279, 8.507059e+37
  %v281 = vand.u32 %v206, 2147483648
  %v282 = vor.u32 1.1754944e-38, %v281
  %v283 = vsel %vm280, %v282, %v278
  %v284 = vmul.f32 %v138, %v283
  %v285 = vrcp.pop %v207
  %v286 = vmul.f32 %v207, %v285
  %v287 = vsub.f32 1.0, %v286
  %v288 = vmul.f32 %v285, %v287
  %v289 = vadd.f32 %v285, %v288
  %vm290 = vweird.f32 %v207
  %vm291 = vweird.f32 %v285
  %vm292 = vmor %vm290, %vm291
  %v293 = vsel %vm292, %v285, %v289
  %v294 = vand.u32 2147483647, %v207
  %vm295 = vcmp.eq.f32.partialorder %v294, 8.507059e+37
  %v296 = vand.u32 %v207, 2147483648
  %v297 = vor.u32 1.1754944e-38, %v296
  %v298 = vsel %vm295, %v297, %v293
  %v299 = vmul.f32 %v141, %v298
  %v300 = vrcp.pop %v208
  %v301 = vmul.f32 %v208, %v300
  %v302 = vsub.f32 1.0, %v301
  %v303 = vmul.f32 %v300, %v302
  %v304 = vadd.f32 %v300, %v303
  %vm305 = vweird.f32 %v208
  %vm306 = vweird.f32 %v300
  %vm307 = vmor %vm305, %vm306
  %v308 = vsel %vm307, %v300, %v304
  %v309 = vand.u32 2147483647, %v208
  %vm310 = vcmp.eq.f32.partialorder %v309, 8.507059e+37
  %v311 = vand.u32 %v208, 2147483648
  %v312 = vor.u32 1.1754944e-38, %v311
  %v313 = vsel %vm310, %v312, %v308
  %v314 = vmul.f32 %v144, %v313
  %v315 = vrcp.pop %v209
  %v316 = vmul.f32 %v209, %v315
  %v317 = vsub.f32 1.0, %v316
  %v318 = vmul.f32 %v315, %v317
  %v319 = vadd.f32 %v315, %v318
  %vm320 = vweird.f32 %v209
  %vm321 = vweird.f32 %v315
  %vm322 = vmor %vm320, %vm321
  %v323 = vsel %vm322, %v315, %v319
  %v324 = vand.u32 2147483647, %v209
  %vm325 = vcmp.eq.f32.partialorder %v324, 8.507059e+37
  %v326 = vand.u32 %v209, 2147483648
  %v327 = vor.u32 1.1754944e-38, %v326
  %v328 = vsel %vm325, %v327, %v323
  %v329 = vmul.f32 %v147, %v328
  %vm330 = vcmask 31744
  %331 = vst.msk [vmem:[%s3] sm:$0xff] %vm330, %v224
  %332 = vst.msk [vmem:[%s3 + $0x8] sm:$0xff] %vm330, %v239
  %333 = vst.msk [vmem:[%s3 + $0x10] sm:$0xff] %vm330, %v254
  %334 = vst.msk [vmem:[%s3 + $0x18] sm:$0xff] %vm330, %v269
  %335 = vst.msk [vmem:[%s3 + $0x20] sm:$0xff] %vm330, %v284
  %336 = vst.msk [vmem:[%s3 + $0x28] sm:$0xff] %vm330, %v299
  %337 = vst.msk [vmem:[%s3 + $0x30] sm:$0xff] %vm330, %v314
  %338 = vst.msk [vmem:[%s3 + $0x38] sm:$0xff] %vm330, %v329
  // Predicated region
  $region14: #{tpu_custom_call.1} parent=0 // pred_check
    _
  $region15: #{tpu_custom_call.1} parent=0 // pred_check_branch
    %340 = sbr.rel (0) target = $region17
  $region16: #{tpu_custom_call.1} parent=0 // pred_region
    _
  $region17: #{tpu_custom_call.1} parent=0 // pred_fallthru
    _
  // Predicated region
  $region18: #{tpu_custom_call.1} parent=0 // pred_check
    _
  $region19: #{tpu_custom_call.1} parent=0 // pred_check_branch
    %342 = sbr.rel (0) target = $region21
  $region20: #{tpu_custom_call.1} parent=0 // pred_region
    _
  $region21: #{tpu_custom_call.1} parent=0 // pred_fallthru
    _

</llo_original>
